<compile_context>
chip_gen: v7x
topology: tpu7x:2x2x1
jax: 0.10.0
libtpu: 0.0.40
codegen_flags: <defaults>
</compile_context>

<pallas_src>
import functools

import jax
import jax.numpy as jnp
import numpy as np
from jax.experimental import pallas as pl
from jax.experimental.pallas import tpu as pltpu


# ------------------------------- kernels -------------------------------------
def _sigmoid(z, approx):
    if approx:
        # exp on EUP + approximate reciprocal on EUP -> no VPU Newton divide.
        return pl.reciprocal(1.0 + jnp.exp(-z), approx=True)
    return jax.nn.sigmoid(z)


def aff_fused_kernel(x_ref, r_ref,
                     w1l_ref, b1l_ref, w2l_ref, b2l_ref,
                     w1gt_ref, b1g_ref, w2g_ref, b2g_ref,
                     o_ref, *, approx_sigmoid):
    # Blocks (channels-first): x/r/o: (1, C, HW).
    # Local weights: (Ci,C), (Ci,1), (C,Ci), (C,1).
    # Global weights pre-transposed so the tiny matvecs are pure VPU broadcast +
    # reduce (no N=1 MXU matmuls): w1gt (C,Ci), b1g (1,Ci), w2g (C,Ci), b2g (C,1).
    x = x_ref[0].astype(jnp.float32)          # (C, HW)
    res = r_ref[0].astype(jnp.float32)        # (C, HW)
    xa = x + res

    # ---- global branch, fused (avoids an extra HBM pass over x and res) ----
    ga = jnp.mean(xa, axis=1, keepdims=True)                                      # (C, 1)
    gh = jnp.maximum(
        jnp.sum(w1gt_ref[...] * ga, axis=0, keepdims=True) + b1g_ref[...], 0.0)   # (1, Ci)
    xg = jnp.sum(w2g_ref[...] * gh, axis=1, keepdims=True) + b2g_ref[...]         # (C, 1)

    # ---- local branch: conv1x1 -> BN -> ReLU -> conv1x1 -> BN (BN folded) ----
    h = jnp.maximum(
        jnp.dot(w1l_ref[...], xa, preferred_element_type=jnp.float32)
        + b1l_ref[...], 0.0)                                                       # (Ci, HW)
    xl = (jnp.dot(w2l_ref[...], h, preferred_element_type=jnp.float32)
          + (b2l_ref[...] + xg))                                                   # (C, HW)

    wei = _sigmoid(xl, approx_sigmoid)
    # 2*x*wei + 2*res*(1-wei) == 2*(res + wei*(x - res))
    o_ref[0] = (2.0 * (res + wei * (x - res))).astype(o_ref.dtype)


def aff_tiled_kernel(x_ref, r_ref, b2_ref, w1l_ref, b1l_ref, w2l_ref,
                     o_ref, *, approx_sigmoid):
    # Blocks: x/r/o: (1, C, T); b2 (per-batch bias2 = bl2 + global-branch xg): (1, C, 1).
    x = x_ref[0].astype(jnp.float32)          # (C, T)
    res = r_ref[0].astype(jnp.float32)
    xa = x + res

    h = jnp.maximum(
        jnp.dot(w1l_ref[...], xa, preferred_element_type=jnp.float32)
        + b1l_ref[...], 0.0)                                                       # (Ci, T)
    xl = (jnp.dot(w2l_ref[...], h, preferred_element_type=jnp.float32)
          + b2_ref[0])                                                             # (C, T)

    wei = _sigmoid(xl, approx_sigmoid)
    o_ref[0] = (2.0 * (res + wei * (x - res))).astype(o_ref.dtype)


# --------------------------- sizing helpers -----------------------------------
def _vmem_capacity_bytes():
    try:
        cap = int(pltpu.get_tpu_info().vmem_capacity_bytes)
        if cap > 0:
            return cap
    except Exception:
        pass
    return 64 * 1024 * 1024  # conservative fallback = v7x per-core VMEM


def _fused_step_bytes(C, HW, Ci, itemsize):
    """Per-grid-step VMEM estimate for the fused (whole-slab) kernel."""
    streams = 2 * 2 * C * HW * itemsize + 2 * C * HW * itemsize   # x, res, out (double-buffered)
    temps = 5 * C * HW * 4 + 2 * Ci * HW * 4                      # f32 intermediates
    weights = 4 * (3 * C * Ci + 3 * C + Ci) * 2
    return streams + temps + weights


def _tiled_step_bytes(C, T, Ci, itemsize):
    streams = 2 * 2 * C * T * itemsize + 2 * C * T * itemsize
    temps = 4 * C * T * 4 + 2 * Ci * T * 4
    weights = 4 * (2 * C * Ci + 2 * C + Ci) * 2
    return streams + temps + weights


def _choose_tile_hw(HW, C, Ci, itemsize, budget, min_tiles=1):
    """Largest lane tile (multiple of 128, or the full extent) dividing HW whose
    pipelined working set fits `budget`; prefer at least `min_tiles` grid steps."""
    cands = [HW] + [t for t in (16384, 8192, 4096, 2048, 1024, 512, 256, 128)
                    if t < HW and HW % t == 0]
    for want in (min_tiles, 1):
        for T in cands:
            if HW // T >= want and _tiled_step_bytes(C, T, Ci, itemsize) <= budget:
                return T
    return cands[-1]


# ----------------------------- pallas_call wrappers ---------------------------
def _aff_fused_call(x, res, wl1, bl1, wl2, bl2, wg1, bg1, wg2, bg2,
                    vmem_limit, approx_sigmoid):
    B, C, HW = x.shape
    Ci = wl1.shape[0]
    wg1_t = jnp.transpose(wg1)        # (C, Ci)
    bg1_row = jnp.transpose(bg1)      # (1, Ci)

    full = lambda shp: pl.BlockSpec(shp, lambda b: (0,) * len(shp))
    grid_spec = pltpu.PrefetchScalarGridSpec(
        num_scalar_prefetch=0,
        grid=(B,),
        in_specs=[
            pl.BlockSpec((1, C, HW), lambda b: (b, 0, 0)),   # x
            pl.BlockSpec((1, C, HW), lambda b: (b, 0, 0)),   # residual
            full((Ci, C)), full((Ci, 1)),                    # local conv1 (BN folded)
            full((C, Ci)), full((C, 1)),                     # local conv2 (BN folded)
            full((C, Ci)), full((1, Ci)),                    # global conv1 (transposed)
            full((C, Ci)), full((C, 1)),                     # global conv2
        ],
        out_specs=pl.BlockSpec((1, C, HW), lambda b: (b, 0, 0)),
    )

    itemsize = x.dtype.itemsize
    cost = pl.CostEstimate(
        flops=4 * B * HW * C * Ci + 12 * B * HW * C,
        transcendentals=B * HW * C,
        bytes_accessed=3 * B * C * HW * itemsize + 4 * (3 * C * Ci + 3 * C + Ci))

    kernel = functools.partial(aff_fused_kernel, approx_sigmoid=approx_sigmoid)
    return pl.pallas_call(
        kernel,
        out_shape=jax.ShapeDtypeStruct((B, C, HW), x.dtype),
        grid_spec=grid_spec,
        compiler_params=pltpu.CompilerParams(
            dimension_semantics=("parallel",),
            vmem_limit_bytes=int(vmem_limit)),
        cost_estimate=cost,
    )(x, res, wl1, bl1, wl2, bl2, wg1_t, bg1_row, wg2, bg2)


def _aff_tiled_call(x, res, b2eff, wl1, bl1, wl2, tile_hw, vmem_limit, approx_sigmoid):
    B, C, HW = x.shape
    Ci = wl1.shape[0]
    T = tile_hw
    assert HW % T == 0 and (T == HW or T % 128 == 0), \
        "tile_hw must divide H*W and be a multiple of 128 (or the full extent)"
    nT = HW // T

    full = lambda shp: pl.BlockSpec(shp, lambda b, t: (0,) * len(shp))
    grid_spec = pltpu.PrefetchScalarGridSpec(
        num_scalar_prefetch=0,
        grid=(B, nT),
        in_specs=[
            pl.BlockSpec((1, C, T), lambda b, t: (b, 0, t)),   # x
            pl.BlockSpec((1, C, T), lambda b, t: (b, 0, t)),   # residual
            pl.BlockSpec((1, C, 1), lambda b, t: (b, 0, 0)),   # per-batch bias2 = bl2 + xg
            full((Ci, C)), full((Ci, 1)),                      # local conv1 (BN folded)
            full((C, Ci)),                                     # local conv2 weight
        ],
        out_specs=pl.BlockSpec((1, C, T), lambda b, t: (b, 0, t)),
    )

    itemsize = x.dtype.itemsize
    cost = pl.CostEstimate(
        flops=4 * B * HW * C * Ci + 10 * B * HW * C,
        transcendentals=B * HW * C,
        bytes_accessed=3 * B * C * HW * itemsize + 4 * (B * C + 2 * C * Ci + Ci))

    kernel = functools.partial(aff_tiled_kernel, approx_sigmoid=approx_sigmoid)
    return pl.pallas_call(
        kernel,
        out_shape=jax.ShapeDtypeStruct((B, C, HW), x.dtype),
        grid_spec=grid_spec,
        compiler_params=pltpu.CompilerParams(
            dimension_semantics=("parallel", "parallel"),
            vmem_limit_bytes=int(vmem_limit)),
        cost_estimate=cost,
    )(x, res, b2eff, wl1, bl1, wl2)


# ----------------------------- module wrapper --------------------------------
def aff_forward(x_nchw, res_nchw, params, *, tile_hw=None, force_tiled=False,
                approx_sigmoid=True):
    """Full AFF.forward semantics (eval-mode BN folded). Inputs NCHW; output dtype
    equals the input dtype (pass bf16 activations for the 2x HBM-byte saving)."""
    wl1, bl1, wl2, bl2, wg1, bg1, wg2, bg2 = params
    assert x_nchw.shape == res_nchw.shape and x_nchw.dtype == res_nchw.dtype
    B, C, H, W = x_nchw.shape
    HW = H * W
    Ci = wl1.shape[0]

    # Channels-first flatten: pure reshape, no transpose / extra HBM pass.
    x = x_nchw.reshape(B, C, HW)
    res = res_nchw.reshape(B, C, HW)
    itemsize = x.dtype.itemsize

    # Generation-aware scoped-VMEM budget: ~48 MiB on v7x (64 MiB physical VMEM),
    # ~96 MiB on v5e/v6e (128 MiB physical).
    vmem_limit = min(_vmem_capacity_bytes() * 3 // 4, 96 * 1024 * 1024)

    use_fused = (not force_tiled and tile_hw is None and
                 _fused_step_bytes(C, HW, Ci, itemsize) <= (vmem_limit * 3) // 5)

    if use_fused:
        # Fast path: whole (C, HW) slab resident, global branch fused in-kernel.
        out = _aff_fused_call(x, res, wl1, bl1, wl2, bl2, wg1, bg1, wg2, bg2,
                              vmem_limit, approx_sigmoid)
    else:
        # Fallback: tile over HW; global branch (avg-pool + two tiny matmuls) is
        # hoisted here and folded into the second conv bias (one fewer stream and
        # broadcast-add per grid step).
        xa_mean = (jnp.mean(x.astype(jnp.float32), axis=2) +
                   jnp.mean(res.astype(jnp.float32), axis=2))                 # (B, C)
        gh = jnp.maximum(xa_mean @ wg1.T + bg1[:, 0], 0.0)                    # (B, Ci)
        xg = gh @ wg2.T + bg2[:, 0]                                           # (B, C)
        b2eff = (bl2[None, :, :] + xg[:, :, None]).astype(jnp.float32)        # (B, C, 1)

        if tile_hw is None:
            # v7x has 2 TensorCores fed by the "parallel" grid axes: make sure a
            # batch-1 launch still exposes >= 2 grid steps.
            min_tiles = 2 if B == 1 else 1
            tile_hw = _choose_tile_hw(HW, C, Ci, itemsize,
                                      budget=vmem_limit // 2, min_tiles=min_tiles)
        out = _aff_tiled_call(x, res, b2eff, wl1, bl1, wl2, tile_hw,
                              vmem_limit, approx_sigmoid)

    return out.reshape(B, C, H, W)


# ----------------------------- parameter setup -------------------------------
def fold_bn(w, b, gamma, beta, mean, var, eps=1e-5):
    """Fold eval-mode BatchNorm into a 1x1 conv stored channels-first (C_out, C_in)."""
    scale = gamma / jnp.sqrt(var + eps)
    w_f = w * scale[:, None]
    b_f = (b - mean) * scale + beta
    return w_f.astype(jnp.float32), b_f.reshape(-1, 1).astype(jnp.float32)


def make_aff_params(key, channels=64, r=4):
    ci = channels // r
    ks = jax.random.split(key, 16)

    def conv_w(k, cout, cin):
        return jax.random.normal(k, (cout, cin), jnp.float32) * (1.0 / np.sqrt(cin))

    def conv_b(k, cout):
        return jax.random.uniform(k, (cout,), jnp.float32, -0.1, 0.1)

    def bn(k, c):
        k1, k2, k3, k4 = jax.random.split(k, 4)
        gamma = 1.0 + 0.1 * jax.random.normal(k1, (c,), jnp.float32)
        beta = 0.1 * jax.random.normal(k2, (c,), jnp.float32)
        mean = 0.1 * jax.random.normal(k3, (c,), jnp.float32)
        var = 1.0 + 0.1 * jax.random.uniform(k4, (c,), jnp.float32)
        return gamma, beta, mean, var

    wl1, bl1 = fold_bn(conv_w(ks[0], ci, channels), conv_b(ks[1], ci), *bn(ks[2], ci))
    wl2, bl2 = fold_bn(conv_w(ks[3], channels, ci), conv_b(ks[4], channels), *bn(ks[5], channels))
    wg1, bg1 = fold_bn(conv_w(ks[6], ci, channels), conv_b(ks[7], ci), *bn(ks[8], ci))
    wg2, bg2 = fold_bn(conv_w(ks[9], channels, ci), conv_b(ks[10], channels), *bn(ks[11], channels))
    return (wl1, bl1, wl2, bl2, wg1, bg1, wg2, bg2)


# ----------------------------- pure-JAX reference -----------------------------
def aff_reference(x_nchw, res_nchw, params):
    wl1, bl1, wl2, bl2, wg1, bg1, wg2, bg2 = params
    B, C, H, W = x_nchw.shape
    x = x_nchw.reshape(B, C, H * W).astype(jnp.float32)
    res = res_nchw.reshape(B, C, H * W).astype(jnp.float32)
    xa = x + res
    h = jnp.maximum(jnp.einsum('oc,bct->bot', wl1, xa) + bl1[None], 0.0)
    xl = jnp.einsum('co,bot->bct', wl2, h) + bl2[None]
    ga = jnp.mean(xa, axis=2)
    gh = jnp.maximum(ga @ wg1.T + bg1[:, 0], 0.0)
    xg = (gh @ wg2.T + bg2[:, 0])[:, :, None]
    wei = jax.nn.sigmoid(xl + xg)
    out = 2.0 * x * wei + 2.0 * res * (1.0 - wei)
    return out.reshape(B, C, H, W)


if __name__ == "__main__":
    channels, r = 64, 4
    B, H, W = 2, 16, 16

    key = jax.random.PRNGKey(0)
    k_x, k_r, k_p = jax.random.split(key, 3)
    x = jax.random.normal(k_x, (B, channels, H, W), jnp.float32)
    residual = jax.random.normal(k_r, (B, channels, H, W), jnp.float32)
    params = make_aff_params(k_p, channels=channels, r=r)

    ref = aff_reference(x, residual, params)

    # 1) f32, fused fast path, exact sigmoid: tight numerical validation.
    out_exact = jax.block_until_ready(
        aff_forward(x, residual, params, approx_sigmoid=False))
    np.testing.assert_allclose(np.asarray(out_exact), np.asarray(ref),
                               rtol=1e-5, atol=1e-5)

    # 2) f32, fused fast path, approx-reciprocal sigmoid (default perf path).
    out = jax.block_until_ready(aff_forward(x, residual, params))
    assert out.shape == (B, channels, H, W) and out.dtype == x.dtype
    np.testing.assert_allclose(np.asarray(out), np.asarray(ref), rtol=2e-2, atol=2e-2)

    # 3) forced tiled path (grid=(B, 2)): hoisted global branch folded into bias2.
    out_t = jax.block_until_ready(
        aff_forward(x, residual, params, tile_hw=128, approx_sigmoid=False))
    np.testing.assert_allclose(np.asarray(out_t), np.asarray(ref), rtol=1e-5, atol=1e-5)

    # 4) bf16 streaming (halves HBM bytes for this bandwidth-bound kernel).
    xb, rb = x.astype(jnp.bfloat16), residual.astype(jnp.bfloat16)
    ref_b = aff_reference(xb.astype(jnp.float32), rb.astype(jnp.float32), params)
    out_b = jax.block_until_ready(aff_forward(xb, rb, params))
    assert out_b.dtype == jnp.bfloat16
    np.testing.assert_allclose(np.asarray(out_b.astype(jnp.float32)),
                               np.asarray(ref_b), rtol=3e-2, atol=3e-2)

    # 5) batch-1 path: PyTorch's duplication skipped (identical under eval-mode BN).
    out1 = jax.block_until_ready(aff_forward(x[:1], residual[:1], params))
    ref1 = aff_reference(x[:1], residual[:1], params)
    np.testing.assert_allclose(np.asarray(out1), np.asarray(ref1), rtol=2e-2, atol=2e-2)

    print("KERNEL_OK")
</pallas_src>

<mosaic_0001>
module attributes {stable_mosaic.version = 11 : i64} {
  func.func @aff_fused_kernel(%arg0: i32, %arg1: memref<1x64x256xf32, #tpu.memory_space<vmem>>, %arg2: memref<1x64x256xf32, #tpu.memory_space<vmem>>, %arg3: memref<16x64xf32, #tpu.memory_space<vmem>>, %arg4: memref<16x1xf32, #tpu.memory_space<vmem>>, %arg5: memref<64x16xf32, #tpu.memory_space<vmem>>, %arg6: memref<64x1xf32, #tpu.memory_space<vmem>>, %arg7: memref<64x16xf32, #tpu.memory_space<vmem>>, %arg8: memref<1x16xf32, #tpu.memory_space<vmem>>, %arg9: memref<64x16xf32, #tpu.memory_space<vmem>>, %arg10: memref<64x1xf32, #tpu.memory_space<vmem>>, %arg11: memref<1x64x256xf32, #tpu.memory_space<vmem>>) attributes {dimension_semantics = [#tpu.dimension_semantics<parallel>], iteration_bounds = array<i64: 2>, scalar_prefetch = 0 : i64, scratch_operands = 0 : i64, tpu.core_type = #tpu.core_type<tc>, window_params = [{transform_indices = @transform_0, window_bounds = array<i64: 1, 64, 256>}, {transform_indices = @transform_1, window_bounds = array<i64: 1, 64, 256>}, {pipeline_mode = #tpu.pipeline_mode<synchronous>, transform_indices = @transform_2, window_bounds = array<i64: 16, 64>}, {pipeline_mode = #tpu.pipeline_mode<synchronous>, transform_indices = @transform_3, window_bounds = array<i64: 16, 1>}, {pipeline_mode = #tpu.pipeline_mode<synchronous>, transform_indices = @transform_4, window_bounds = array<i64: 64, 16>}, {pipeline_mode = #tpu.pipeline_mode<synchronous>, transform_indices = @transform_5, window_bounds = array<i64: 64, 1>}, {pipeline_mode = #tpu.pipeline_mode<synchronous>, transform_indices = @transform_6, window_bounds = array<i64: 64, 16>}, {pipeline_mode = #tpu.pipeline_mode<synchronous>, transform_indices = @transform_7, window_bounds = array<i64: 1, 16>}, {pipeline_mode = #tpu.pipeline_mode<synchronous>, transform_indices = @transform_8, window_bounds = array<i64: 64, 16>}, {pipeline_mode = #tpu.pipeline_mode<synchronous>, transform_indices = @transform_9, window_bounds = array<i64: 64, 1>}, {transform_indices = @transform_10, window_bounds = array<i64: 1, 64, 256>}]} {
    %c0 = arith.constant 0 : index
    %c0_0 = arith.constant 0 : index
    %c0_1 = arith.constant 0 : index
    %0 = vector.load %arg1[%c0, %c0_0, %c0_1] : memref<1x64x256xf32, #tpu.memory_space<vmem>>, vector<1x64x256xf32>
    %1 = vector.shape_cast %0 : vector<1x64x256xf32> to vector<64x256xf32>
    %c0_2 = arith.constant 0 : index
    %c0_3 = arith.constant 0 : index
    %c0_4 = arith.constant 0 : index
    %2 = vector.load %arg2[%c0_2, %c0_3, %c0_4] : memref<1x64x256xf32, #tpu.memory_space<vmem>>, vector<1x64x256xf32>
    %3 = vector.shape_cast %2 : vector<1x64x256xf32> to vector<64x256xf32>
    %4 = arith.addf %1, %3 : vector<64x256xf32>
    %cst = arith.constant dense<0.000000e+00> : vector<64xf32>
    %5 = vector.multi_reduction <add>, %4, %cst [1] : vector<64x256xf32> to vector<64xf32>
    %6 = vector.shape_cast %5 : vector<64xf32> to vector<64x1xf32>
    %cst_5 = arith.constant 2.560000e+02 : f32
    %7 = vector.broadcast %cst_5 : f32 to vector<64x1xf32>
    %8 = arith.divf %6, %7 : vector<64x1xf32>
    %c0_6 = arith.constant 0 : index
    %c0_7 = arith.constant 0 : index
    %9 = vector.load %arg7[%c0_6, %c0_7] : memref<64x16xf32, #tpu.memory_space<vmem>>, vector<64x16xf32>
    %10 = vector.broadcast %8 : vector<64x1xf32> to vector<64x16xf32>
    %11 = arith.mulf %9, %10 : vector<64x16xf32>
    %cst_8 = arith.constant dense<0.000000e+00> : vector<16xf32>
    %12 = vector.multi_reduction <add>, %11, %cst_8 [0] : vector<64x16xf32> to vector<16xf32>
    %13 = vector.shape_cast %12 : vector<16xf32> to vector<1x16xf32>
    %c0_9 = arith.constant 0 : index
    %c0_10 = arith.constant 0 : index
    %14 = vector.load %arg8[%c0_9, %c0_10] : memref<1x16xf32, #tpu.memory_space<vmem>>, vector<1x16xf32>
    %15 = arith.addf %13, %14 : vector<1x16xf32>
    %cst_11 = arith.constant 0.000000e+00 : f32
    %16 = vector.broadcast %cst_11 : f32 to vector<1x16xf32>
    %17 = arith.maximumf %15, %16 : vector<1x16xf32>
    %c0_12 = arith.constant 0 : index
    %c0_13 = arith.constant 0 : index
    %18 = vector.load %arg9[%c0_12, %c0_13] : memref<64x16xf32, #tpu.memory_space<vmem>>, vector<64x16xf32>
    %19 = vector.broadcast %17 : vector<1x16xf32> to vector<64x16xf32>
    %20 = arith.mulf %18, %19 : vector<64x16xf32>
    %cst_14 = arith.constant dense<0.000000e+00> : vector<64xf32>
    %21 = vector.multi_reduction <add>, %20, %cst_14 [1] : vector<64x16xf32> to vector<64xf32>
    %22 = vector.shape_cast %21 : vector<64xf32> to vector<64x1xf32>
    %c0_15 = arith.constant 0 : index
    %c0_16 = arith.constant 0 : index
    %23 = vector.load %arg10[%c0_15, %c0_16] : memref<64x1xf32, #tpu.memory_space<vmem>>, vector<64x1xf32>
    %24 = arith.addf %22, %23 : vector<64x1xf32>
    %c0_17 = arith.constant 0 : index
    %c0_18 = arith.constant 0 : index
    %25 = vector.load %arg3[%c0_17, %c0_18] : memref<16x64xf32, #tpu.memory_space<vmem>>, vector<16x64xf32>
    %cst_19 = arith.constant dense<0.000000e+00> : vector<16x256xf32>
    %26 = tpu.matmul %25, %4, %cst_19 {dimension_numbers = #tpu.dot_dimension_numbers<[1], [0], [0], [1], [0, 0, 1, 1], [], []>} : vector<16x64xf32>, vector<64x256xf32>, vector<16x256xf32> -> vector<16x256xf32>
    %c0_20 = arith.constant 0 : index
    %c0_21 = arith.constant 0 : index
    %27 = vector.load %arg4[%c0_20, %c0_21] : memref<16x1xf32, #tpu.memory_space<vmem>>, vector<16x1xf32>
    %28 = vector.broadcast %27 : vector<16x1xf32> to vector<16x256xf32>
    %29 = arith.addf %26, %28 : vector<16x256xf32>
    %cst_22 = arith.constant 0.000000e+00 : f32
    %30 = vector.broadcast %cst_22 : f32 to vector<16x256xf32>
    %31 = arith.maximumf %29, %30 : vector<16x256xf32>
    %c0_23 = arith.constant 0 : index
    %c0_24 = arith.constant 0 : index
    %32 = vector.load %arg5[%c0_23, %c0_24] : memref<64x16xf32, #tpu.memory_space<vmem>>, vector<64x16xf32>
    %cst_25 = arith.constant dense<0.000000e+00> : vector<64x256xf32>
    %33 = tpu.matmul %32, %31, %cst_25 {dimension_numbers = #tpu.dot_dimension_numbers<[1], [0], [0], [1], [0, 0, 1, 1], [], []>} : vector<64x16xf32>, vector<16x256xf32>, vector<64x256xf32> -> vector<64x256xf32>
    %c0_26 = arith.constant 0 : index
    %c0_27 = arith.constant 0 : index
    %34 = vector.load %arg6[%c0_26, %c0_27] : memref<64x1xf32, #tpu.memory_space<vmem>>, vector<64x1xf32>
    %35 = arith.addf %34, %24 : vector<64x1xf32>
    %36 = vector.broadcast %35 : vector<64x1xf32> to vector<64x256xf32>
    %37 = arith.addf %33, %36 : vector<64x256xf32>
    %38 = arith.negf %37 : vector<64x256xf32>
    %39 = math.exp %38 : vector<64x256xf32>
    %cst_28 = arith.constant 1.000000e+00 : f32
    %40 = vector.broadcast %cst_28 : f32 to vector<64x256xf32>
    %41 = arith.addf %40, %39 : vector<64x256xf32>
    %42 = arith.divf %40, %41 : vector<64x256xf32>
    %43 = arith.subf %1, %3 : vector<64x256xf32>
    %44 = arith.mulf %42, %43 : vector<64x256xf32>
    %45 = arith.addf %3, %44 : vector<64x256xf32>
    %cst_29 = arith.constant 2.000000e+00 : f32
    %46 = vector.broadcast %cst_29 : f32 to vector<64x256xf32>
    %47 = arith.mulf %46, %45 : vector<64x256xf32>
    %c0_30 = arith.constant 0 : index
    %c0_31 = arith.constant 0 : index
    %c0_32 = arith.constant 0 : index
    %48 = vector.load %arg11[%c0_30, %c0_31, %c0_32] : memref<1x64x256xf32, #tpu.memory_space<vmem>>, vector<1x64x256xf32>
    %49 = vector.shape_cast %48 : vector<1x64x256xf32> to vector<64x256xf32>
    %50 = vector.shape_cast %47 : vector<64x256xf32> to vector<1x64x256xf32>
    tpu.vector_store %arg11[%c0_30, %c0_31, %c0_32], %50 {strides = array<i32>} : memref<1x64x256xf32, #tpu.memory_space<vmem>>, vector<1x64x256xf32>,
    return
  }
  func.func @transform_0(%arg0: i32) -> (i32, i32, i32) {
    %c0_i32 = arith.constant 0 : i32
    %c0_i32_0 = arith.constant 0 : i32
    %c0_i32_1 = arith.constant 0 : i32
    return %arg0, %c0_i32, %c0_i32_0 : i32, i32, i32
  }
  func.func @transform_1(%arg0: i32) -> (i32, i32, i32) {
    %c0_i32 = arith.constant 0 : i32
    %c0_i32_0 = arith.constant 0 : i32
    %c0_i32_1 = arith.constant 0 : i32
    return %arg0, %c0_i32, %c0_i32_0 : i32, i32, i32
  }
  func.func @transform_2(%arg0: i32) -> (i32, i32) {
    %c0_i32 = arith.constant 0 : i32
    %c0_i32_0 = arith.constant 0 : i32
    %c0_i32_1 = arith.constant 0 : i32
    return %c0_i32, %c0_i32_0 : i32, i32
  }
  func.func @transform_3(%arg0: i32) -> (i32, i32) {
    %c0_i32 = arith.constant 0 : i32
    %c0_i32_0 = arith.constant 0 : i32
    %c0_i32_1 = arith.constant 0 : i32
    return %c0_i32, %c0_i32_0 : i32, i32
  }
  func.func @transform_4(%arg0: i32) -> (i32, i32) {
    %c0_i32 = arith.constant 0 : i32
    %c0_i32_0 = arith.constant 0 : i32
    %c0_i32_1 = arith.constant 0 : i32
    return %c0_i32, %c0_i32_0 : i32, i32
  }
  func.func @transform_5(%arg0: i32) -> (i32, i32) {
    %c0_i32 = arith.constant 0 : i32
    %c0_i32_0 = arith.constant 0 : i32
    %c0_i32_1 = arith.constant 0 : i32
    return %c0_i32, %c0_i32_0 : i32, i32
  }
  func.func @transform_6(%arg0: i32) -> (i32, i32) {
    %c0_i32 = arith.constant 0 : i32
    %c0_i32_0 = arith.constant 0 : i32
    %c0_i32_1 = arith.constant 0 : i32
    return %c0_i32, %c0_i32_0 : i32, i32
  }
  func.func @transform_7(%arg0: i32) -> (i32, i32) {
    %c0_i32 = arith.constant 0 : i32
    %c0_i32_0 = arith.constant 0 : i32
    %c0_i32_1 = arith.constant 0 : i32
    return %c0_i32, %c0_i32_0 : i32, i32
  }
  func.func @transform_8(%arg0: i32) -> (i32, i32) {
    %c0_i32 = arith.constant 0 : i32
    %c0_i32_0 = arith.constant 0 : i32
    %c0_i32_1 = arith.constant 0 : i32
    return %c0_i32, %c0_i32_0 : i32, i32
  }
  func.func @transform_9(%arg0: i32) -> (i32, i32) {
    %c0_i32 = arith.constant 0 : i32
    %c0_i32_0 = arith.constant 0 : i32
    %c0_i32_1 = arith.constant 0 : i32
    return %c0_i32, %c0_i32_0 : i32, i32
  }
  func.func @transform_10(%arg0: i32) -> (i32, i32, i32) {
    %c0_i32 = arith.constant 0 : i32
    %c0_i32_0 = arith.constant 0 : i32
    %c0_i32_1 = arith.constant 0 : i32
    return %arg0, %c0_i32, %c0_i32_0 : i32, i32, i32
  }
}

</mosaic_0001>

<llo_original>
// kernel: tpu_custom_call.1
$region0: #{tpu_custom_call.1}
  #allocation0 [shape = 'u32[]', space=smem, size = 0x4, offset = 0x4, fixed_abs, tag = 'smem constant byte address 0x4 - core index']
  #allocation1 [shape = 'u32[144,128]{1,0:T(1,128)}', space=vmem, size = 0x12000, scoped, tag = 'internal scratch']
  %s0 = inlined_call_operand.vmem [shape: f32[2,64,256], index: 0, kind: input, shape index: {}]
  %s1 = inlined_call_operand.hbm [shape: f32[2,64,256], index: 1, kind: input, shape index: {}]
  %s2 = inlined_call_operand.vmem [shape: f32[16,64], index: 2, kind: input, shape index: {}]
  %s3 = inlined_call_operand.vmem [shape: f32[16,1], index: 3, kind: input, shape index: {}]
  %s4 = inlined_call_operand.vmem [shape: f32[64,16], index: 4, kind: input, shape index: {}]
  %s5 = inlined_call_operand.vmem [shape: f32[64,1], index: 5, kind: input, shape index: {}]
  %s6 = inlined_call_operand.vmem [shape: f32[64,16], index: 6, kind: input, shape index: {}]
  %s7 = inlined_call_operand.vmem [shape: f32[1,16], index: 7, kind: input, shape index: {}]
  %s8 = inlined_call_operand.vmem [shape: f32[64,16], index: 8, kind: input, shape index: {}]
  %s9 = inlined_call_operand.vmem [shape: f32[64,1], index: 9, kind: input, shape index: {}]
  %s10 = inlined_call_operand.hbm [shape: f32[2,64,256], index: 10, kind: output, shape index: {}]
  %s11 = sld [smem:[#allocation0]]
  $region77: #{tpu_custom_call.1} parent=0
    _
  %s13 = ssub.s32 1, %s11
  %s14 = scalar_select 0, %s13, %s11
  $region1: #{tpu_custom_call.1} parent=0
    #allocation2 [shape = 'u8[131072]{0}', space=vmem, size = 0x20000, scoped, tag = 'input window, operand 1']
    #allocation3 [shape = 's32[2]{0}', space=sflag, size = 0x8, scoped, tag = 'scoped memory for tpu_custom_call.1']
    #allocation4 [shape = 's32[2]{0}', space=sflag, size = 0x8, scoped, tag = 'scoped memory for tpu_custom_call.1']
    #allocation5 [shape = 'u8[131072]{0}', space=vmem, size = 0x20000, scoped, tag = 'output window, operand 0']
    %15 = vsyncpa [#allocation3], 0
    %s16 = scalar_lea.sflag [#allocation3], 1
    %17 = vsyncpa %s16, 0
    %18 = vsyncpa [#allocation4], 0
    %s19 = scalar_lea.sflag [#allocation4], 1
    %20 = vsyncpa %s19, 0
    loop: start=0, step=1, limit=4
    $region2: #{tpu_custom_call.1} parent=1 // loop_pre_header
      _
    $region3: #{tpu_custom_call.1} parent=1 // loop_header
      %s22 = sphi 0, %s26
      %p23 = scmp.ge.s32.totalorder %s22, 4
      %s32 = sphi 0, %s34
      %s35 = sphi 0, %s32
      %s36 = sphi 0, %s35
      %s52 = sphi 0, %s36
      %s58 = sphi 0, %s60
      %s61 = sphi 0, %s58
      %s62 = sphi 0, %s61
      %s78 = sphi 0, %s62
      %s82 = sphi 0, %s82
      %s84 = sphi 0, %s82
      %s85 = sphi 0, %s84
      %s99 = sphi 0, %s85
      %s103 = sphi 0, %s103
      %s105 = sphi 0, %s103
      %s106 = sphi 0, %s105
      %s120 = sphi 0, %s106
      %s124 = sphi 0, %s124
      %s126 = sphi 0, %s124
      %s127 = sphi 0, %s126
      %s141 = sphi 0, %s127
      %s145 = sphi 0, %s145
      %s147 = sphi 0, %s145
      %s148 = sphi 0, %s147
      %s162 = sphi 0, %s148
      %s166 = sphi 0, %s166
      %s168 = sphi 0, %s166
      %s169 = sphi 0, %s168
      %s183 = sphi 0, %s169
      %s187 = sphi 0, %s187
      %s189 = sphi 0, %s187
      %s190 = sphi 0, %s189
      %s204 = sphi 0, %s190
      %s208 = sphi 0, %s208
      %s210 = sphi 0, %s208
      %s211 = sphi 0, %s210
      %s225 = sphi 0, %s211
      %s229 = sphi 0, %s229
      %s231 = sphi 0, %s229
      %s232 = sphi 0, %s231
      %s246 = sphi 0, %s232
      %s252 = sphi 0, %s254
      %s255 = sphi 0, %s252
      %s256 = sphi 0, %s255
      %s272 = sphi 0, %s256
    $region4: #{tpu_custom_call.1} parent=1 // loop_header_branch
      %25 = sbr.rel (%p23) target = $region8
    $region5: #{tpu_custom_call.1} parent=1 // loop_body
      %s27 = ssub.s32 %s22, 1
      %s28 = ssub.s32 %s22, 2
      %s29 = sadd.s32 %s22, 1
      %s30 = ssub.s32 %s22, %s29
      %p31 = scmp.eq.s32.totalorder %s30, 0
      %s33 = sadd.s32 %s32, 1
      %s34 = scalar_select %p31, %s32, %s33
      %p37 = pneg %p31
      %p38 = scmp.eq.s32.totalorder %s22, 1
      %p39 = por %p37, %p38
      %p40 = scmp.ne.s32.totalorder %s32, %s35
      %p41 = scmp.eq.s32.totalorder %s22, 0
      %p42 = por %p40, %p41
      %p43 = scmp.ne.s32.totalorder %s32, %s35
      %p44 = scmp.eq.s32.totalorder %s27, 1
      %p45 = por %p43, %p44
      %p46 = scmp.ne.s32.totalorder %s35, %s36
      %p47 = scmp.eq.s32.totalorder %s27, 0
      %p48 = por %p46, %p47
      %p49 = scmp.ne.s32.totalorder %s35, %s36
      %p50 = scmp.eq.s32.totalorder %s28, 1
      %p51 = por %p49, %p50
      %p53 = scmp.ne.s32.totalorder %s36, %s52
      %p54 = scmp.eq.s32.totalorder %s28, 0
      %p55 = por %p53, %p54
      %s56 = ssub.s32 %s22, %s29
      %p57 = scmp.eq.s32.totalorder %s56, 0
      %s59 = sadd.s32 %s58, 1
      %s60 = scalar_select %p57, %s58, %s59
      %p63 = pneg %p57
      %p64 = scmp.eq.s32.totalorder %s22, 1
      %p65 = por %p63, %p64
      %p66 = scmp.ne.s32.totalorder %s58, %s61
      %p67 = scmp.eq.s32.totalorder %s22, 0
      %p68 = por %p66, %p67
      %p69 = scmp.ne.s32.totalorder %s58, %s61
      %p70 = scmp.eq.s32.totalorder %s27, 1
      %p71 = por %p69, %p70
      %p72 = scmp.ne.s32.totalorder %s61, %s62
      %p73 = scmp.eq.s32.totalorder %s27, 0
      %p74 = por %p72, %p73
      %p75 = scmp.ne.s32.totalorder %s61, %s62
      %p76 = scmp.eq.s32.totalorder %s28, 1
      %p77 = por %p75, %p76
      %p79 = scmp.ne.s32.totalorder %s62, %s78
      %p80 = scmp.eq.s32.totalorder %s28, 0
      %p81 = por %p79, %p80
      %s83 = sadd.s32 %s82, 1
      %p86 = scmp.eq.s32.totalorder %s22, 1
      %p87 = scmp.ne.s32.totalorder %s82, %s84
      %p88 = scmp.eq.s32.totalorder %s22, 0
      %p89 = por %p87, %p88
      %p90 = scmp.ne.s32.totalorder %s82, %s84
      %p91 = scmp.eq.s32.totalorder %s27, 1
      %p92 = por %p90, %p91
      %p93 = scmp.ne.s32.totalorder %s84, %s85
      %p94 = scmp.eq.s32.totalorder %s27, 0
      %p95 = por %p93, %p94
      %p96 = scmp.ne.s32.totalorder %s84, %s85
      %p97 = scmp.eq.s32.totalorder %s28, 1
      %p98 = por %p96, %p97
      %p100 = scmp.ne.s32.totalorder %s85, %s99
      %p101 = scmp.eq.s32.totalorder %s28, 0
      %p102 = por %p100, %p101
      %s104 = sadd.s32 %s103, 1
      %p107 = scmp.eq.s32.totalorder %s22, 1
      %p108 = scmp.ne.s32.totalorder %s103, %s105
      %p109 = scmp.eq.s32.totalorder %s22, 0
      %p110 = por %p108, %p109
      %p111 = scmp.ne.s32.totalorder %s103, %s105
      %p112 = scmp.eq.s32.totalorder %s27, 1
      %p113 = por %p111, %p112
      %p114 = scmp.ne.s32.totalorder %s105, %s106
      %p115 = scmp.eq.s32.totalorder %s27, 0
      %p116 = por %p114, %p115
      %p117 = scmp.ne.s32.totalorder %s105, %s106
      %p118 = scmp.eq.s32.totalorder %s28, 1
      %p119 = por %p117, %p118
      %p121 = scmp.ne.s32.totalorder %s106, %s120
      %p122 = scmp.eq.s32.totalorder %s28, 0
      %p123 = por %p121, %p122
      %s125 = sadd.s32 %s124, 1
      %p128 = scmp.eq.s32.totalorder %s22, 1
      %p129 = scmp.ne.s32.totalorder %s124, %s126
      %p130 = scmp.eq.s32.totalorder %s22, 0
      %p131 = por %p129, %p130
      %p132 = scmp.ne.s32.totalorder %s124, %s126
      %p133 = scmp.eq.s32.totalorder %s27, 1
      %p134 = por %p132, %p133
      %p135 = scmp.ne.s32.totalorder %s126, %s127
      %p136 = scmp.eq.s32.totalorder %s27, 0
      %p137 = por %p135, %p136
      %p138 = scmp.ne.s32.totalorder %s126, %s127
      %p139 = scmp.eq.s32.totalorder %s28, 1
      %p140 = por %p138, %p139
      %p142 = scmp.ne.s32.totalorder %s127, %s141
      %p143 = scmp.eq.s32.totalorder %s28, 0
      %p144 = por %p142, %p143
      %s146 = sadd.s32 %s145, 1
      %p149 = scmp.eq.s32.totalorder %s22, 1
      %p150 = scmp.ne.s32.totalorder %s145, %s147
      %p151 = scmp.eq.s32.totalorder %s22, 0
      %p152 = por %p150, %p151
      %p153 = scmp.ne.s32.totalorder %s145, %s147
      %p154 = scmp.eq.s32.totalorder %s27, 1
      %p155 = por %p153, %p154
      %p156 = scmp.ne.s32.totalorder %s147, %s148
      %p157 = scmp.eq.s32.totalorder %s27, 0
      %p158 = por %p156, %p157
      %p159 = scmp.ne.s32.totalorder %s147, %s148
      %p160 = scmp.eq.s32.totalorder %s28, 1
      %p161 = por %p159, %p160
      %p163 = scmp.ne.s32.totalorder %s148, %s162
      %p164 = scmp.eq.s32.totalorder %s28, 0
      %p165 = por %p163, %p164
      %s167 = sadd.s32 %s166, 1
      %p170 = scmp.eq.s32.totalorder %s22, 1
      %p171 = scmp.ne.s32.totalorder %s166, %s168
      %p172 = scmp.eq.s32.totalorder %s22, 0
      %p173 = por %p171, %p172
      %p174 = scmp.ne.s32.totalorder %s166, %s168
      %p175 = scmp.eq.s32.totalorder %s27, 1
      %p176 = por %p174, %p175
      %p177 = scmp.ne.s32.totalorder %s168, %s169
      %p178 = scmp.eq.s32.totalorder %s27, 0
      %p179 = por %p177, %p178
      %p180 = scmp.ne.s32.totalorder %s168, %s169
      %p181 = scmp.eq.s32.totalorder %s28, 1
      %p182 = por %p180, %p181
      %p184 = scmp.ne.s32.totalorder %s169, %s183
      %p185 = scmp.eq.s32.totalorder %s28, 0
      %p186 = por %p184, %p185
      %s188 = sadd.s32 %s187, 1
      %p191 = scmp.eq.s32.totalorder %s22, 1
      %p192 = scmp.ne.s32.totalorder %s187, %s189
      %p193 = scmp.eq.s32.totalorder %s22, 0
      %p194 = por %p192, %p193
      %p195 = scmp.ne.s32.totalorder %s187, %s189
      %p196 = scmp.eq.s32.totalorder %s27, 1
      %p197 = por %p195, %p196
      %p198 = scmp.ne.s32.totalorder %s189, %s190
      %p199 = scmp.eq.s32.totalorder %s27, 0
      %p200 = por %p198, %p199
      %p201 = scmp.ne.s32.totalorder %s189, %s190
      %p202 = scmp.eq.s32.totalorder %s28, 1
      %p203 = por %p201, %p202
      %p205 = scmp.ne.s32.totalorder %s190, %s204
      %p206 = scmp.eq.s32.totalorder %s28, 0
      %p207 = por %p205, %p206
      %s209 = sadd.s32 %s208, 1
      %p212 = scmp.eq.s32.totalorder %s22, 1
      %p213 = scmp.ne.s32.totalorder %s208, %s210
      %p214 = scmp.eq.s32.totalorder %s22, 0
      %p215 = por %p213, %p214
      %p216 = scmp.ne.s32.totalorder %s208, %s210
      %p217 = scmp.eq.s32.totalorder %s27, 1
      %p218 = por %p216, %p217
      %p219 = scmp.ne.s32.totalorder %s210, %s211
      %p220 = scmp.eq.s32.totalorder %s27, 0
      %p221 = por %p219, %p220
      %p222 = scmp.ne.s32.totalorder %s210, %s211
      %p223 = scmp.eq.s32.totalorder %s28, 1
      %p224 = por %p222, %p223
      %p226 = scmp.ne.s32.totalorder %s211, %s225
      %p227 = scmp.eq.s32.totalorder %s28, 0
      %p228 = por %p226, %p227
      %s230 = sadd.s32 %s229, 1
      %p233 = scmp.eq.s32.totalorder %s22, 1
      %p234 = scmp.ne.s32.totalorder %s229, %s231
      %p235 = scmp.eq.s32.totalorder %s22, 0
      %p236 = por %p234, %p235
      %p237 = scmp.ne.s32.totalorder %s229, %s231
      %p238 = scmp.eq.s32.totalorder %s27, 1
      %p239 = por %p237, %p238
      %p240 = scmp.ne.s32.totalorder %s231, %s232
      %p241 = scmp.eq.s32.totalorder %s27, 0
      %p242 = por %p240, %p241
      %p243 = scmp.ne.s32.totalorder %s231, %s232
      %p244 = scmp.eq.s32.totalorder %s28, 1
      %p245 = por %p243, %p244
      %p247 = scmp.ne.s32.totalorder %s232, %s246
      %p248 = scmp.eq.s32.totalorder %s28, 0
      %p249 = por %p247, %p248
      %s250 = ssub.s32 %s22, %s29
      %p251 = scmp.eq.s32.totalorder %s250, 0
      %s253 = sadd.s32 %s252, 1
      %s254 = scalar_select %p251, %s252, %s253
      %p257 = pneg %p251
      %p258 = scmp.eq.s32.totalorder %s22, 1
      %p259 = por %p257, %p258
      %p260 = scmp.ne.s32.totalorder %s252, %s255
      %p261 = scmp.eq.s32.totalorder %s22, 0
      %p262 = por %p260, %p261
      %p263 = scmp.ne.s32.totalorder %s252, %s255
      %p264 = scmp.eq.s32.totalorder %s27, 1
      %p265 = por %p263, %p264
      %p266 = scmp.ne.s32.totalorder %s255, %s256
      %p267 = scmp.eq.s32.totalorder %s27, 0
      %p268 = por %p266, %p267
      %p269 = scmp.ne.s32.totalorder %s255, %s256
      %p270 = scmp.eq.s32.totalorder %s28, 1
      %p271 = por %p269, %p270
      %p273 = scmp.ne.s32.totalorder %s256, %s272
      %p274 = scmp.eq.s32.totalorder %s28, 0
      %p275 = por %p273, %p274
      %p276 = scmp.le.s32.totalorder 1, %s22
      %p277 = scmp.lt.s32.totalorder %s22, 3
      %p278 = pnand %p276, %p277
      %p279 = pneg %p278
      // Predicated region
      $region9: #{tpu_custom_call.1} parent=5 // pred_check
        _
      $region10: #{tpu_custom_call.1} parent=5 // pred_check_branch
        %281 = sbr.rel (%p278) target = $region12
      $region11: #{tpu_custom_call.1} parent=5 // pred_region
        %s282 = ssub.s32 %s22, 1
        // Predicated region
        $region13: #{tpu_custom_call.1} parent=11 // pred_check
          %p283 = pneg %p95
        $region14: #{tpu_custom_call.1} parent=11 // pred_check_branch
          %285 = sbr.rel (%p283) target = $region16
        $region15: #{tpu_custom_call.1} parent=11 // pred_region
          _
        $region16: #{tpu_custom_call.1} parent=11 // pred_fallthru
          _
        // Predicated region
        $region17: #{tpu_custom_call.1} parent=11 // pred_check
          %p286 = pneg %p116
        $region18: #{tpu_custom_call.1} parent=11 // pred_check_branch
          %288 = sbr.rel (%p286) target = $region20
        $region19: #{tpu_custom_call.1} parent=11 // pred_region
          _
        $region20: #{tpu_custom_call.1} parent=11 // pred_fallthru
          _
        // Predicated region
        $region21: #{tpu_custom_call.1} parent=11 // pred_check
          %p289 = pneg %p137
        $region22: #{tpu_custom_call.1} parent=11 // pred_check_branch
          %291 = sbr.rel (%p289) target = $region24
        $region23: #{tpu_custom_call.1} parent=11 // pred_region
          _
        $region24: #{tpu_custom_call.1} parent=11 // pred_fallthru
          _
        // Predicated region
        $region25: #{tpu_custom_call.1} parent=11 // pred_check
          %p292 = pneg %p158
        $region26: #{tpu_custom_call.1} parent=11 // pred_check_branch
          %294 = sbr.rel (%p292) target = $region28
        $region27: #{tpu_custom_call.1} parent=11 // pred_region
          _
        $region28: #{tpu_custom_call.1} parent=11 // pred_fallthru
          _
        // Predicated region
        $region29: #{tpu_custom_call.1} parent=11 // pred_check
          %p295 = pneg %p179
        $region30: #{tpu_custom_call.1} parent=11 // pred_check_branch
          %297 = sbr.rel (%p295) target = $region32
        $region31: #{tpu_custom_call.1} parent=11 // pred_region
          _
        $region32: #{tpu_custom_call.1} parent=11 // pred_fallthru
          _
        // Predicated region
        $region33: #{tpu_custom_call.1} parent=11 // pred_check
          %p298 = pneg %p200
        $region34: #{tpu_custom_call.1} parent=11 // pred_check_branch
          %300 = sbr.rel (%p298) target = $region36
        $region35: #{tpu_custom_call.1} parent=11 // pred_region
          _
        $region36: #{tpu_custom_call.1} parent=11 // pred_fallthru
          _
        // Predicated region
        $region37: #{tpu_custom_call.1} parent=11 // pred_check
          %p301 = pneg %p221
        $region38: #{tpu_custom_call.1} parent=11 // pred_check_branch
          %303 = sbr.rel (%p301) target = $region40
        $region39: #{tpu_custom_call.1} parent=11 // pred_region
          _
        $region40: #{tpu_custom_call.1} parent=11 // pred_fallthru
          _
        // Predicated region
        $region41: #{tpu_custom_call.1} parent=11 // pred_check
          %p304 = pneg %p242
        $region42: #{tpu_custom_call.1} parent=11 // pred_check_branch
          %306 = sbr.rel (%p304) target = $region44
        $region43: #{tpu_custom_call.1} parent=11 // pred_region
          _
        $region44: #{tpu_custom_call.1} parent=11 // pred_fallthru
          _
      $region12: #{tpu_custom_call.1} parent=5 // pred_fallthru
        _
      %p307 = scmp.lt.s32.totalorder %s22, 2
      // Predicated region
      $region45: #{tpu_custom_call.1} parent=5 // pred_check
        %p308 = pneg %p307
      $region46: #{tpu_custom_call.1} parent=5 // pred_check_branch
        %310 = sbr.rel (%p308) target = $region48
      $region47: #{tpu_custom_call.1} parent=5 // pred_region
        // Predicated region
        $region49: #{tpu_custom_call.1} parent=47 // pred_check
          %p311 = pneg %p42
        $region50: #{tpu_custom_call.1} parent=47 // pred_check_branch
          %313 = sbr.rel (%p311) target = $region52
        $region51: #{tpu_custom_call.1} parent=47 // pred_region
          %p314 = scmp.lt.s32.totalorder %s22, 1
          %s315 = scalar_select %p314, %s22, 1
          %s316 = smul.addr %s315, 16
          %s317 = smul.addr %s316, 8
          %s318 = scalar_lea.vmem %s0, %s317
        $region52: #{tpu_custom_call.1} parent=47 // pred_fallthru
          _
        // Predicated region
        $region53: #{tpu_custom_call.1} parent=47 // pred_check
          %p319 = pneg %p68
        $region54: #{tpu_custom_call.1} parent=47 // pred_check_branch
          %321 = sbr.rel (%p319) target = $region56
        $region55: #{tpu_custom_call.1} parent=47 // pred_region
          %s322 = sand.u32 %s58, 1
          %s323 = scalar_lea.sflag [#allocation3], %s322
          %s324 = sand.u32 %s58, 1
          %s325 = smul.addr %s324, 128
          %s326 = scalar_lea.vmem [#allocation2], %s325
          %s328 = ssub.s32 2048, 2048
          %329 = vsyncadd %s323, %s328
          %s330 = smul.addr %s22, 16
          %s331 = smul.addr %s330, 128
          %s332 = scalar_lea.hbm %s1, %s331
          %s333 = sshll.u32 %s326, 4
          %s334 = int_to_ptr.vmem [resolvable:$true] %s333
          %339 = dma.hbm_to_vmem [thread:$0]  %s332, 2048, %s334, %s323, 256, 256, 16
        $region56: #{tpu_custom_call.1} parent=47 // pred_fallthru
          _
      $region48: #{tpu_custom_call.1} parent=5 // pred_fallthru
        _
      %p340 = scmp.le.s32.totalorder 1, %s22
      %p341 = scmp.lt.s32.totalorder %s22, 3
      %p342 = pnand %p340, %p341
      %p343 = pneg %p342
      // Predicated region
      $region57: #{tpu_custom_call.1} parent=5 // pred_check
        _
      $region58: #{tpu_custom_call.1} parent=5 // pred_check_branch
        %345 = sbr.rel (%p342) target = $region60
      $region59: #{tpu_custom_call.1} parent=5 // pred_region
        %s346 = ssub.s32 %s22, 1
        %s347 = sand.u32 %s61, 1
        %s348 = scalar_lea.sflag [#allocation3], %s347
        %s349 = sand.u32 %s61, 1
        %s350 = smul.addr %s349, 128
        %s351 = scalar_lea.vmem [#allocation2], %s350
        // Predicated region
        $region61: #{tpu_custom_call.1} parent=59 // pred_check
          %p352 = pneg %p74
        $region62: #{tpu_custom_call.1} parent=59 // pred_check_branch
          %354 = sbr.rel (%p352) target = $region64
        $region63: #{tpu_custom_call.1} parent=59 // pred_region
          %355 = dma.done %s348, 2048
        $region64: #{tpu_custom_call.1} parent=59 // pred_fallthru
          _
        %p356 = scmp.lt.s32.totalorder %s27, 1
        %s357 = scalar_select %p356, %s27, 1
        %s358 = smul.addr %s357, 16
        %s359 = smul.addr %s358, 8
        %s360 = scalar_lea.vmem %s0, %s359
        %p361 = pneg %p48
        %p362 = pneg %p45
        %s363 = sand.u32 %s61, 1
        %s364 = scalar_lea.sflag [#allocation3], %s363
        %s365 = sand.u32 %s61, 1
        %s366 = smul.addr %s365, 128
        %s367 = scalar_lea.vmem [#allocation2], %s366
        %p368 = pneg %p74
        %p369 = pneg %p71
        %p370 = pneg %p95
        %p371 = pneg %p92
        %p372 = pneg %p116
        %p373 = pneg %p113
        %p374 = pneg %p137
        %p375 = pneg %p134
        %p376 = pneg %p158
        %p377 = pneg %p155
        %p378 = pneg %p179
        %p379 = pneg %p176
        %p380 = pneg %p200
        %p381 = pneg %p197
        %p382 = pneg %p221
        %p383 = pneg %p218
        %p384 = pneg %p242
        %p385 = pneg %p239
        %p386 = pneg %p268
        %p387 = pneg %p265
        %s388 = sand.u32 %s255, 1
        %s389 = scalar_lea.sflag [#allocation4], %s388
        %s390 = sand.u32 %s255, 1
        %s391 = smul.addr %s390, 128
        %s392 = scalar_lea.vmem [#allocation5], %s391
        %p393 = scmp.lt.s32.totalorder %s27, 1
        %s394 = scalar_select %p393, %s27, 1
        %s395 = smul.addr %s394, 16
        %s396 = smul.addr %s395, 8
        %s397 = scalar_lea.vmem %s0, %s396
        %v398 = vld [vmem:[%s397] sm:$0xff]
        %v399 = vld [vmem:[%s397 + $0x8] sm:$0xff]
        %v400 = vld [vmem:[%s397 + $0x10] sm:$0xff]
        %v401 = vld [vmem:[%s397 + $0x18] sm:$0xff]
        %v402 = vld [vmem:[%s397 + $0x20] sm:$0xff]
        %v403 = vld [vmem:[%s397 + $0x28] sm:$0xff]
        %v404 = vld [vmem:[%s397 + $0x30] sm:$0xff]
        %v405 = vld [vmem:[%s397 + $0x38] sm:$0xff]
        %v406 = vld [vmem:[%s397 + $0x40] sm:$0xff]
        %v407 = vld [vmem:[%s397 + $0x48] sm:$0xff]
        %v408 = vld [vmem:[%s397 + $0x50] sm:$0xff]
        %v409 = vld [vmem:[%s397 + $0x58] sm:$0xff]
        %v410 = vld [vmem:[%s397 + $0x60] sm:$0xff]
        %v411 = vld [vmem:[%s397 + $0x68] sm:$0xff]
        %v412 = vld [vmem:[%s397 + $0x70] sm:$0xff]
        %v413 = vld [vmem:[%s397 + $0x78] sm:$0xff]
        %v414 = vld [vmem:[%s351] sm:$0xff]
        %v415 = vld [vmem:[%s351 + $0x8] sm:$0xff]
        %v416 = vld [vmem:[%s351 + $0x10] sm:$0xff]
        %v417 = vld [vmem:[%s351 + $0x18] sm:$0xff]
        %v418 = vld [vmem:[%s351 + $0x20] sm:$0xff]
        %v419 = vld [vmem:[%s351 + $0x28] sm:$0xff]
        %v420 = vld [vmem:[%s351 + $0x30] sm:$0xff]
        %v421 = vld [vmem:[%s351 + $0x38] sm:$0xff]
        %v422 = vld [vmem:[%s351 + $0x40] sm:$0xff]
        %v423 = vld [vmem:[%s351 + $0x48] sm:$0xff]
        %v424 = vld [vmem:[%s351 + $0x50] sm:$0xff]
        %v425 = vld [vmem:[%s351 + $0x58] sm:$0xff]
        %v426 = vld [vmem:[%s351 + $0x60] sm:$0xff]
        %v427 = vld [vmem:[%s351 + $0x68] sm:$0xff]
        %v428 = vld [vmem:[%s351 + $0x70] sm:$0xff]
        %v429 = vld [vmem:[%s351 + $0x78] sm:$0xff]
        %v430 = vadd.f32 %v398, %v414
        %v431 = vadd.f32 %v399, %v415
        %v432 = vadd.f32 %v400, %v416
        %v433 = vadd.f32 %v401, %v417
        %v434 = vadd.f32 %v402, %v418
        %v435 = vadd.f32 %v403, %v419
        %v436 = vadd.f32 %v404, %v420
        %v437 = vadd.f32 %v405, %v421
        %v438 = vadd.f32 %v406, %v422
        %v439 = vadd.f32 %v407, %v423
        %v440 = vadd.f32 %v408, %v424
        %v441 = vadd.f32 %v409, %v425
        %v442 = vadd.f32 %v410, %v426
        %v443 = vadd.f32 %v411, %v427
        %v444 = vadd.f32 %v412, %v428
        %v445 = vadd.f32 %v413, %v429
        %v446 = vadd.f32 %v430, %v431
        %447 = vadd.xlane.f32.xlu0 %v446
        %v448 = vpop.xlane.xlu0 %447
        %v449 = vadd.f32 %v432, %v433
        %450 = vadd.xlane.f32.xlu0 %v449
        %v451 = vpop.xlane.xlu0 %450
        %v452 = vadd.f32 %v434, %v435
        %453 = vadd.xlane.f32.xlu0 %v452
        %v454 = vpop.xlane.xlu0 %453
        %v455 = vadd.f32 %v436, %v437
        %456 = vadd.xlane.f32.xlu0 %v455
        %v457 = vpop.xlane.xlu0 %456
        %v458 = vadd.f32 %v438, %v439
        %459 = vadd.xlane.f32.xlu0 %v458
        %v460 = vpop.xlane.xlu0 %459
        %v461 = vadd.f32 %v440, %v441
        %462 = vadd.xlane.f32.xlu0 %v461
        %v463 = vpop.xlane.xlu0 %462
        %v464 = vadd.f32 %v442, %v443
        %465 = vadd.xlane.f32.xlu0 %v464
        %v466 = vpop.xlane.xlu0 %465
        %v467 = vadd.f32 %v444, %v445
        %468 = vadd.xlane.f32.xlu0 %v467
        %v469 = vpop.xlane.xlu0 %468
        %v470 = vrcp.pop 256.0
        %v471 = vmul.f32 %v448, %v470
        %v472 = vmul.f32 %v451, %v470
        %v473 = vmul.f32 %v454, %v470
        %v474 = vmul.f32 %v457, %v470
        %v475 = vmul.f32 %v460, %v470
        %v476 = vmul.f32 %v463, %v470
        %v477 = vmul.f32 %v466, %v470
        %v478 = vmul.f32 %v469, %v470
        %v479 = vld [vmem:[%s6] sm:$0xff]
        %v480 = vld [vmem:[%s6 + $0x8] sm:$0xff]
        %v481 = vld [vmem:[%s6 + $0x10] sm:$0xff]
        %v482 = vld [vmem:[%s6 + $0x18] sm:$0xff]
        %v483 = vld [vmem:[%s6 + $0x20] sm:$0xff]
        %v484 = vld [vmem:[%s6 + $0x28] sm:$0xff]
        %v485 = vld [vmem:[%s6 + $0x30] sm:$0xff]
        %v486 = vld [vmem:[%s6 + $0x38] sm:$0xff]
        %v487 = vmul.f32 %v479, %v471
        %v488 = vmul.f32 %v480, %v472
        %v489 = vmul.f32 %v481, %v473
        %v490 = vmul.f32 %v482, %v474
        %v491 = vmul.f32 %v483, %v475
        %v492 = vmul.f32 %v484, %v476
        %v493 = vmul.f32 %v485, %v477
        %v494 = vmul.f32 %v486, %v478
        %vm495 = vcmask 130048
        %v496 = vsel %vm495, %v487, 0.0
        %v497 = vsel %vm495, %v488, 0.0
        %v498 = vadd.f32 %v496, %v497
        %v499 = vsel %vm495, %v489, 0.0
        %v500 = vadd.f32 %v498, %v499
        %v501 = vsel %vm495, %v490, 0.0
        %v502 = vadd.f32 %v500, %v501
        %v503 = vsel %vm495, %v491, 0.0
        %v504 = vadd.f32 %v502, %v503
        %v505 = vsel %vm495, %v492, 0.0
        %v506 = vadd.f32 %v504, %v505
        %v507 = vsel %vm495, %v493, 0.0
        %v508 = vadd.f32 %v506, %v507
        %v509 = vsel %vm495, %v494, 0.0
        %v510 = vadd.f32 %v508, %v509
        %v511 = vrot.slane %v510, 4
        %v512 = vadd.f32 %v510, %v511
        %v513 = vrot.slane %v512, 2
        %v514 = vadd.f32 %v512, %v513
        %v515 = vrot.slane %v514, 1
        %v516 = vadd.f32 %v514, %v515
        %v517 = vld [vmem:[%s7] sm:$0x1]
        %v518 = vadd.f32 %v516, %v517
        %v519 = vmax.f32 %v518, 0.0
        %v520 = vld [vmem:[%s8] sm:$0xff]
        %v521 = vld [vmem:[%s8 + $0x8] sm:$0xff]
        %v522 = vld [vmem:[%s8 + $0x10] sm:$0xff]
        %v523 = vld [vmem:[%s8 + $0x18] sm:$0xff]
        %v524 = vld [vmem:[%s8 + $0x20] sm:$0xff]
        %v525 = vld [vmem:[%s8 + $0x28] sm:$0xff]
        %v526 = vld [vmem:[%s8 + $0x30] sm:$0xff]
        %v527 = vld [vmem:[%s8 + $0x38] sm:$0xff]
        %v528 = vlaneseq
        %v529 = vshrl.u32 %v528, 7
        %v530 = vsub.s32 0, %v529
        %v531 = vrot.slane %v519, %v530
        %v532 = vmul.f32 %v520, %v531
        %v533 = vmul.f32 %v521, %v531
        %v534 = vmul.f32 %v522, %v531
        %v535 = vmul.f32 %v523, %v531
        %v536 = vmul.f32 %v524, %v531
        %v537 = vmul.f32 %v525, %v531
        %v538 = vmul.f32 %v526, %v531
        %v539 = vmul.f32 %v527, %v531
        %v540 = vsel %vm495, %v532, 0.0
        %541 = vadd.xlane.f32.xlu0 %v540
        %v542 = vpop.xlane.xlu0 %541
        %v543 = vsel %vm495, %v533, 0.0
        %544 = vadd.xlane.f32.xlu0 %v543
        %v545 = vpop.xlane.xlu0 %544
        %v546 = vsel %vm495, %v534, 0.0
        %547 = vadd.xlane.f32.xlu0 %v546
        %v548 = vpop.xlane.xlu0 %547
        %v549 = vsel %vm495, %v535, 0.0
        %550 = vadd.xlane.f32.xlu0 %v549
        %v551 = vpop.xlane.xlu0 %550
        %v552 = vsel %vm495, %v536, 0.0
        %553 = vadd.xlane.f32.xlu0 %v552
        %v554 = vpop.xlane.xlu0 %553
        %v555 = vsel %vm495, %v537, 0.0
        %556 = vadd.xlane.f32.xlu0 %v555
        %v557 = vpop.xlane.xlu0 %556
        %v558 = vsel %vm495, %v538, 0.0
        %559 = vadd.xlane.f32.xlu0 %v558
        %v560 = vpop.xlane.xlu0 %559
        %v561 = vsel %vm495, %v539, 0.0
        %562 = vadd.xlane.f32.xlu0 %v561
        %v563 = vpop.xlane.xlu0 %562
        %v564 = vld [vmem:[%s9] sm:$0xff]
        %v565 = vld [vmem:[%s9 + $0x8] sm:$0xff]
        %v566 = vld [vmem:[%s9 + $0x10] sm:$0xff]
        %v567 = vld [vmem:[%s9 + $0x18] sm:$0xff]
        %v568 = vld [vmem:[%s9 + $0x20] sm:$0xff]
        %v569 = vld [vmem:[%s9 + $0x28] sm:$0xff]
        %v570 = vld [vmem:[%s9 + $0x30] sm:$0xff]
        %v571 = vld [vmem:[%s9 + $0x38] sm:$0xff]
        %v572 = vadd.f32 %v542, %v564
        %v573 = vadd.f32 %v545, %v565
        %v574 = vadd.f32 %v548, %v566
        %v575 = vadd.f32 %v551, %v567
        %v576 = vadd.f32 %v554, %v568
        %v577 = vadd.f32 %v557, %v569
        %v578 = vadd.f32 %v560, %v570
        %v579 = vadd.f32 %v563, %v571
        %v580 = vld [vmem:[%s2] sm:$0xff]
        %v581 = vld [vmem:[%s2 + $0x8] sm:$0xff]
        %v582 = vld [vmem:[%s3] sm:$0xff]
        %v583 = vld [vmem:[%s3 + $0x8] sm:$0xff]
        %585 = vset.pattern.permute.xlu0 0
        %586 = vperm.xlu0 %585, %v582
        %v587 = vpop.permute.xlu0 %586
        %590 = vset.pattern.permute.xlu0 0
        %591 = vperm.xlu0 %590, %v583
        %v592 = vpop.permute.xlu0 %591
        %vm594 = vcmask 523264
        %v596 = vsel %vm594, %v580, 0
        %v599 = vsel %vm594, %v581, 0
        %601 = vmatprep.subr.mxu0 %v431
        %602 = vmatpush1.msra.mxu0 %v430
        %603 = vmatprep.subr.mxu0 %v433
        %604 = vmatpush1.msra.mxu0 %v432
        %605 = vmatprep.subr.mxu0 %v435
        %606 = vmatpush1.msra.mxu0 %v434
        %607 = vmatprep.subr.mxu0 %v437
        %608 = vmatpush1.msra.mxu0 %v436
        %609 = vmatprep.subr.mxu0 %v439
        %610 = vmatpush1.msra.mxu0 %v438
        %611 = vmatprep.subr.mxu0 %v441
        %612 = vmatpush1.msra.mxu0 %v440
        %613 = vmatprep.subr.mxu0 %v443
        %614 = vmatpush1.msra.mxu0 %v442
        %615 = vmatprep.subr.mxu0 %v445
        %616 = vmatpush1.msra.mxu0 %v444
        %617 = vmatprep.subr.mxu0 0.0
        %618 = vmatpush1.msra.mxu0 0.0
        %619 = vmatprep.subr.mxu0 0.0
        %620 = vmatpush1.msra.mxu0 0.0
        %621 = vmatprep.subr.mxu0 0.0
        %622 = vmatpush1.msra.mxu0 0.0
        %623 = vmatprep.subr.mxu0 0.0
        %624 = vmatpush1.msra.mxu0 0.0
        %625 = vmatprep.subr.mxu0 0.0
        %626 = vmatpush1.msra.mxu0 0.0
        %627 = vmatprep.subr.mxu0 0.0
        %628 = vmatpush1.msra.mxu0 0.0
        %629 = vmatprep.subr.mxu0 0.0
        %630 = vmatpush1.msra.mxu0 0.0
        %631 = vmatprep.subr.mxu0 0.0
        %632 = vmatpush1.msra.mxu0 0.0
        %633 = vmatprep.subr.mxu0 0.0
        %634 = vmatpush1.msra.mxu0 0.0
        %635 = vmatprep.subr.mxu0 0.0
        %636 = vmatpush1.msra.mxu0 0.0
        %637 = vmatprep.subr.mxu0 0.0
        %638 = vmatpush1.msra.mxu0 0.0
        %639 = vmatprep.subr.mxu0 0.0
        %640 = vmatpush1.msra.mxu0 0.0
        %641 = vmatprep.subr.mxu0 0.0
        %642 = vmatpush1.msra.mxu0 0.0
        %643 = vmatprep.subr.mxu0 0.0
        %644 = vmatpush1.msra.mxu0 0.0
        %645 = vmatprep.subr.mxu0 0.0
        %646 = vmatpush1.msra.mxu0 0.0
        %647 = vmatprep.subr.mxu0 0.0
        %648 = vmatpush1.msra.mxu0 0.0
        %649 = vmatprep.subr.mxu0 0.0
        %650 = vmatpush1.msra.mxu0 0.0
        %651 = vmatprep.subr.mxu0 0.0
        %652 = vmatpush1.msra.mxu0 0.0
        %653 = vmatprep.subr.mxu0 0.0
        %654 = vmatpush1.msra.mxu0 0.0
        %655 = vmatprep.subr.mxu0 0.0
        %656 = vmatpush1.msra.mxu0 0.0
        %657 = vmatprep.subr.mxu0 0.0
        %658 = vmatpush1.msra.mxu0 0.0
        %659 = vmatprep.subr.mxu0 0.0
        %660 = vmatpush1.msra.mxu0 0.0
        %661 = vmatprep.subr.mxu0 0.0
        %662 = vmatpush1.msra.mxu0 0.0
        %663 = vmatprep.subr.mxu0 0.0
        %664 = vmatpush1.msra.mxu0 0.0
        %665 = vmatprep.mubr.f32.mxu0 0.0
        %666 = vmatmul.mubr.f32.gmra.mrb[0].mxu0 %v596
        %v667 = vpop.f32.mrb[0].mxu0
        %v668 = vadd.f32 %v587, %v667
        %v669 = vpop.f32.mrb[0].mxu0
        %v670 = vadd.f32 %v587, %v669
        %671 = vmatprep.mubr.f32.mxu0 0.0
        %672 = vmatmul.mubr.f32.gmra.mrb[0].mxu0 %v599
        %v673 = vpop.f32.mrb[0].mxu0
        %v674 = vadd.f32 %v592, %v673
        %v675 = vpop.f32.mrb[0].mxu0
        %v676 = vadd.f32 %v592, %v675
        %677 = vdwg.mxu0
        %v678 = vmax.f32 %v668, 0.0
        %v679 = vmax.f32 %v670, 0.0
        %v680 = vmax.f32 %v674, 0.0
        %v681 = vmax.f32 %v676, 0.0
        %v682 = vld [vmem:[%s4] sm:$0xff]
        %v683 = vld [vmem:[%s4 + $0x8] sm:$0xff]
        %v684 = vld [vmem:[%s4 + $0x10] sm:$0xff]
        %v685 = vld [vmem:[%s4 + $0x18] sm:$0xff]
        %v686 = vld [vmem:[%s4 + $0x20] sm:$0xff]
        %v687 = vld [vmem:[%s4 + $0x28] sm:$0xff]
        %v688 = vld [vmem:[%s4 + $0x30] sm:$0xff]
        %v689 = vld [vmem:[%s4 + $0x38] sm:$0xff]
        %v690 = vld [vmem:[%s5] sm:$0xff]
        %v691 = vld [vmem:[%s5 + $0x8] sm:$0xff]
        %v692 = vld [vmem:[%s5 + $0x10] sm:$0xff]
        %v693 = vld [vmem:[%s5 + $0x18] sm:$0xff]
        %v694 = vld [vmem:[%s5 + $0x20] sm:$0xff]
        %v695 = vld [vmem:[%s5 + $0x28] sm:$0xff]
        %v696 = vld [vmem:[%s5 + $0x30] sm:$0xff]
        %v697 = vld [vmem:[%s5 + $0x38] sm:$0xff]
        %v698 = vadd.f32 %v690, %v572
        %v699 = vadd.f32 %v691, %v573
        %v700 = vadd.f32 %v692, %v574
        %v701 = vadd.f32 %v693, %v575
        %v702 = vadd.f32 %v694, %v576
        %v703 = vadd.f32 %v695, %v577
        %v704 = vadd.f32 %v696, %v578
        %v705 = vadd.f32 %v697, %v579
        %707 = vset.pattern.permute.xlu0 0
        %708 = vperm.xlu0 %707, %v698
        %v709 = vpop.permute.xlu0 %708
        %712 = vset.pattern.permute.xlu0 0
        %713 = vperm.xlu0 %712, %v699
        %v714 = vpop.permute.xlu0 %713
        %717 = vset.pattern.permute.xlu0 0
        %718 = vperm.xlu0 %717, %v700
        %v719 = vpop.permute.xlu0 %718
        %722 = vset.pattern.permute.xlu0 0
        %723 = vperm.xlu0 %722, %v701
        %v724 = vpop.permute.xlu0 %723
        %727 = vset.pattern.permute.xlu0 0
        %728 = vperm.xlu0 %727, %v702
        %v729 = vpop.permute.xlu0 %728
        %732 = vset.pattern.permute.xlu0 0
        %733 = vperm.xlu0 %732, %v703
        %v734 = vpop.permute.xlu0 %733
        %737 = vset.pattern.permute.xlu0 0
        %738 = vperm.xlu0 %737, %v704
        %v739 = vpop.permute.xlu0 %738
        %742 = vset.pattern.permute.xlu0 0
        %743 = vperm.xlu0 %742, %v705
        %v744 = vpop.permute.xlu0 %743
        %v747 = vsel %vm495, %v682, 0
        %v750 = vsel %vm495, %v683, 0
        %v753 = vsel %vm495, %v684, 0
        %v756 = vsel %vm495, %v685, 0
        %v759 = vsel %vm495, %v686, 0
        %v762 = vsel %vm495, %v687, 0
        %v765 = vsel %vm495, %v688, 0
        %v768 = vsel %vm495, %v689, 0
        %770 = vmatprep.subr.mxu0 %v679
        %771 = vmatpush1.msra.mxu0 %v678
        %772 = vmatprep.subr.mxu0 %v681
        %773 = vmatpush1.msra.mxu0 %v680
        %774 = vmatprep.subr.mxu0 0.0
        %775 = vmatpush1.msra.mxu0 0.0
        %776 = vmatprep.subr.mxu0 0.0
        %777 = vmatpush1.msra.mxu0 0.0
        %778 = vmatprep.subr.mxu0 0.0
        %779 = vmatpush1.msra.mxu0 0.0
        %780 = vmatprep.subr.mxu0 0.0
        %781 = vmatpush1.msra.mxu0 0.0
        %782 = vmatprep.subr.mxu0 0.0
        %783 = vmatpush1.msra.mxu0 0.0
        %784 = vmatprep.subr.mxu0 0.0
        %785 = vmatpush1.msra.mxu0 0.0
        %786 = vmatprep.subr.mxu0 0.0
        %787 = vmatpush1.msra.mxu0 0.0
        %788 = vmatprep.subr.mxu0 0.0
        %789 = vmatpush1.msra.mxu0 0.0
        %790 = vmatprep.subr.mxu0 0.0
        %791 = vmatpush1.msra.mxu0 0.0
        %792 = vmatprep.subr.mxu0 0.0
        %793 = vmatpush1.msra.mxu0 0.0
        %794 = vmatprep.subr.mxu0 0.0
        %795 = vmatpush1.msra.mxu0 0.0
        %796 = vmatprep.subr.mxu0 0.0
        %797 = vmatpush1.msra.mxu0 0.0
        %798 = vmatprep.subr.mxu0 0.0
        %799 = vmatpush1.msra.mxu0 0.0
        %800 = vmatprep.subr.mxu0 0.0
        %801 = vmatpush1.msra.mxu0 0.0
        %802 = vmatprep.subr.mxu0 0.0
        %803 = vmatpush1.msra.mxu0 0.0
        %804 = vmatprep.subr.mxu0 0.0
        %805 = vmatpush1.msra.mxu0 0.0
        %806 = vmatprep.subr.mxu0 0.0
        %807 = vmatpush1.msra.mxu0 0.0
        %808 = vmatprep.subr.mxu0 0.0
        %809 = vmatpush1.msra.mxu0 0.0
        %810 = vmatprep.subr.mxu0 0.0
        %811 = vmatpush1.msra.mxu0 0.0
        %812 = vmatprep.subr.mxu0 0.0
        %813 = vmatpush1.msra.mxu0 0.0
        %814 = vmatprep.subr.mxu0 0.0
        %815 = vmatpush1.msra.mxu0 0.0
        %816 = vmatprep.subr.mxu0 0.0
        %817 = vmatpush1.msra.mxu0 0.0
        %818 = vmatprep.subr.mxu0 0.0
        %819 = vmatpush1.msra.mxu0 0.0
        %820 = vmatprep.subr.mxu0 0.0
        %821 = vmatpush1.msra.mxu0 0.0
        %822 = vmatprep.subr.mxu0 0.0
        %823 = vmatpush1.msra.mxu0 0.0
        %824 = vmatprep.subr.mxu0 0.0
        %825 = vmatpush1.msra.mxu0 0.0
        %826 = vmatprep.subr.mxu0 0.0
        %827 = vmatpush1.msra.mxu0 0.0
        %828 = vmatprep.subr.mxu0 0.0
        %829 = vmatpush1.msra.mxu0 0.0
        %830 = vmatprep.subr.mxu0 0.0
        %831 = vmatpush1.msra.mxu0 0.0
        %832 = vmatprep.subr.mxu0 0.0
        %833 = vmatpush1.msra.mxu0 0.0
        %834 = vmatprep.mubr.f32.mxu0 0.0
        %835 = vmatmul.mubr.f32.gmra.mrb[0].mxu0 %v747
        %v836 = vpop.f32.mrb[0].mxu0
        %v837 = vadd.f32 %v709, %v836
        %v838 = vpop.f32.mrb[0].mxu0
        %v839 = vadd.f32 %v709, %v838
        %840 = vmatprep.mubr.f32.mxu0 0.0
        %841 = vmatmul.mubr.f32.gmra.mrb[0].mxu0 %v750
        %v842 = vpop.f32.mrb[0].mxu0
        %v843 = vadd.f32 %v714, %v842
        %v844 = vpop.f32.mrb[0].mxu0
        %v845 = vadd.f32 %v714, %v844
        %846 = vmatprep.mubr.f32.mxu0 0.0
        %847 = vmatmul.mubr.f32.gmra.mrb[0].mxu0 %v753
        %v848 = vpop.f32.mrb[0].mxu0
        %v849 = vadd.f32 %v719, %v848
        %v850 = vpop.f32.mrb[0].mxu0
        %v851 = vadd.f32 %v719, %v850
        %852 = vmatprep.mubr.f32.mxu0 0.0
        %853 = vmatmul.mubr.f32.gmra.mrb[0].mxu0 %v756
        %v854 = vpop.f32.mrb[0].mxu0
        %v855 = vadd.f32 %v724, %v854
        %v856 = vpop.f32.mrb[0].mxu0
        %v857 = vadd.f32 %v724, %v856
        %858 = vmatprep.mubr.f32.mxu0 0.0
        %859 = vmatmul.mubr.f32.gmra.mrb[0].mxu0 %v759
        %v860 = vpop.f32.mrb[0].mxu0
        %v861 = vadd.f32 %v729, %v860
        %v862 = vpop.f32.mrb[0].mxu0
        %v863 = vadd.f32 %v729, %v862
        %864 = vmatprep.mubr.f32.mxu0 0.0
        %865 = vmatmul.mubr.f32.gmra.mrb[0].mxu0 %v762
        %v866 = vpop.f32.mrb[0].mxu0
        %v867 = vadd.f32 %v734, %v866
        %v868 = vpop.f32.mrb[0].mxu0
        %v869 = vadd.f32 %v734, %v868
        %870 = vmatprep.mubr.f32.mxu0 0.0
        %871 = vmatmul.mubr.f32.gmra.mrb[0].mxu0 %v765
        %v872 = vpop.f32.mrb[0].mxu0
        %v873 = vadd.f32 %v739, %v872
        %v874 = vpop.f32.mrb[0].mxu0
        %v875 = vadd.f32 %v739, %v874
        %876 = vmatprep.mubr.f32.mxu0 0.0
        %877 = vmatmul.mubr.f32.gmra.mrb[0].mxu0 %v768
        %v878 = vpop.f32.mrb[0].mxu0
        %v879 = vadd.f32 %v744, %v878
        %v880 = vpop.f32.mrb[0].mxu0
        %v881 = vadd.f32 %v744, %v880
        %882 = vdwg.mxu0
        %v883 = vxor.u32 %v837, 2147483648
        %v884 = vxor.u32 %v839, 2147483648
        %v885 = vxor.u32 %v843, 2147483648
        %v886 = vxor.u32 %v845, 2147483648
        %v887 = vxor.u32 %v849, 2147483648
        %v888 = vxor.u32 %v851, 2147483648
        %v889 = vxor.u32 %v855, 2147483648
        %v890 = vxor.u32 %v857, 2147483648
        %v891 = vxor.u32 %v861, 2147483648
        %v892 = vxor.u32 %v863, 2147483648
        %v893 = vxor.u32 %v867, 2147483648
        %v894 = vxor.u32 %v869, 2147483648
        %v895 = vxor.u32 %v873, 2147483648
        %v896 = vxor.u32 %v875, 2147483648
        %v897 = vxor.u32 %v879, 2147483648
        %v898 = vxor.u32 %v881, 2147483648
        %v899 = vmul.f32 %v883, 1.442695
        %v900 = vpow.pop %v899
        %v901 = vmul.f32 %v884, 1.442695
        %v902 = vpow.pop %v901
        %v903 = vmul.f32 %v885, 1.442695
        %v904 = vpow.pop %v903
        %v905 = vmul.f32 %v886, 1.442695
        %v906 = vpow.pop %v905
        %v907 = vmul.f32 %v887, 1.442695
        %v908 = vpow.pop %v907
        %v909 = vmul.f32 %v888, 1.442695
        %v910 = vpow.pop %v909
        %v911 = vmul.f32 %v889, 1.442695
        %v912 = vpow.pop %v911
        %v913 = vmul.f32 %v890, 1.442695
        %v914 = vpow.pop %v913
        %v915 = vmul.f32 %v891, 1.442695
        %v916 = vpow.pop %v915
        %v917 = vmul.f32 %v892, 1.442695
        %v918 = vpow.pop %v917
        %v919 = vmul.f32 %v893, 1.442695
        %v920 = vpow.pop %v919
        %v921 = vmul.f32 %v894, 1.442695
        %v922 = vpow.pop %v921
        %v923 = vmul.f32 %v895, 1.442695
        %v924 = vpow.pop %v923
        %v925 = vmul.f32 %v896, 1.442695
        %v926 = vpow.pop %v925
        %v927 = vmul.f32 %v897, 1.442695
        %v928 = vpow.pop %v927
        %v929 = vmul.f32 %v898, 1.442695
        %v930 = vpow.pop %v929
        %v931 = vadd.f32 %v900, 1.0
        %v932 = vadd.f32 %v902, 1.0
        %v933 = vadd.f32 %v904, 1.0
        %v934 = vadd.f32 %v906, 1.0
        %v935 = vadd.f32 %v908, 1.0
        %v936 = vadd.f32 %v910, 1.0
        %v937 = vadd.f32 %v912, 1.0
        %v938 = vadd.f32 %v914, 1.0
        %v939 = vadd.f32 %v916, 1.0
        %v940 = vadd.f32 %v918, 1.0
        %v941 = vadd.f32 %v920, 1.0
        %v942 = vadd.f32 %v922, 1.0
        %v943 = vadd.f32 %v924, 1.0
        %v944 = vadd.f32 %v926, 1.0
        %v945 = vadd.f32 %v928, 1.0
        %v946 = vadd.f32 %v930, 1.0
        %v947 = vrcp.pop %v931
        %v948 = vmul.f32 1.0, %v947
        %v949 = vrcp.pop %v932
        %v950 = vmul.f32 1.0, %v949
        %v951 = vrcp.pop %v933
        %v952 = vmul.f32 1.0, %v951
        %v953 = vrcp.pop %v934
        %v954 = vmul.f32 1.0, %v953
        %v955 = vrcp.pop %v935
        %v956 = vmul.f32 1.0, %v955
        %v957 = vrcp.pop %v936
        %v958 = vmul.f32 1.0, %v957
        %v959 = vrcp.pop %v937
        %v960 = vmul.f32 1.0, %v959
        %v961 = vrcp.pop %v938
        %v962 = vmul.f32 1.0, %v961
        %v963 = vrcp.pop %v939
        %v964 = vmul.f32 1.0, %v963
        %v965 = vrcp.pop %v940
        %v966 = vmul.f32 1.0, %v965
        %v967 = vrcp.pop %v941
        %v968 = vmul.f32 1.0, %v967
        %v969 = vrcp.pop %v942
        %v970 = vmul.f32 1.0, %v969
        %v971 = vrcp.pop %v943
        %v972 = vmul.f32 1.0, %v971
        %v973 = vrcp.pop %v944
        %v974 = vmul.f32 1.0, %v973
        %v975 = vrcp.pop %v945
        %v976 = vmul.f32 1.0, %v975
        %v977 = vrcp.pop %v946
        %v978 = vmul.f32 1.0, %v977
        %v979 = vsub.f32 %v398, %v414
        %v980 = vsub.f32 %v399, %v415
        %v981 = vsub.f32 %v400, %v416
        %v982 = vsub.f32 %v401, %v417
        %v983 = vsub.f32 %v402, %v418
        %v984 = vsub.f32 %v403, %v419
        %v985 = vsub.f32 %v404, %v420
        %v986 = vsub.f32 %v405, %v421
        %v987 = vsub.f32 %v406, %v422
        %v988 = vsub.f32 %v407, %v423
        %v989 = vsub.f32 %v408, %v424
        %v990 = vsub.f32 %v409, %v425
        %v991 = vsub.f32 %v410, %v426
        %v992 = vsub.f32 %v411, %v427
        %v993 = vsub.f32 %v412, %v428
        %v994 = vsub.f32 %v413, %v429
        %v995 = vmul.f32 %v948, %v979
        %v996 = vmul.f32 %v950, %v980
        %v997 = vmul.f32 %v952, %v981
        %v998 = vmul.f32 %v954, %v982
        %v999 = vmul.f32 %v956, %v983
        %v1000 = vmul.f32 %v958, %v984
        %v1001 = vmul.f32 %v960, %v985
        %v1002 = vmul.f32 %v962, %v986
        %v1003 = vmul.f32 %v964, %v987
        %v1004 = vmul.f32 %v966, %v988
        %v1005 = vmul.f32 %v968, %v989
        %v1006 = vmul.f32 %v970, %v990
        %v1007 = vmul.f32 %v972, %v991
        %v1008 = vmul.f32 %v974, %v992
        %v1009 = vmul.f32 %v976, %v993
        %v1010 = vmul.f32 %v978, %v994
        %v1011 = vadd.f32 %v414, %v995
        %v1012 = vadd.f32 %v415, %v996
        %v1013 = vadd.f32 %v416, %v997
        %v1014 = vadd.f32 %v417, %v998
        %v1015 = vadd.f32 %v418, %v999
        %v1016 = vadd.f32 %v419, %v1000
        %v1017 = vadd.f32 %v420, %v1001
        %v1018 = vadd.f32 %v421, %v1002
        %v1019 = vadd.f32 %v422, %v1003
        %v1020 = vadd.f32 %v423, %v1004
        %v1021 = vadd.f32 %v424, %v1005
        %v1022 = vadd.f32 %v425, %v1006
        %v1023 = vadd.f32 %v426, %v1007
        %v1024 = vadd.f32 %v427, %v1008
        %v1025 = vadd.f32 %v428, %v1009
        %v1026 = vadd.f32 %v429, %v1010
        %v1027 = vmul.f32 %v1011, 2.0
        %v1028 = vmul.f32 %v1012, 2.0
        %v1029 = vmul.f32 %v1013, 2.0
        %v1030 = vmul.f32 %v1014, 2.0
        %v1031 = vmul.f32 %v1015, 2.0
        %v1032 = vmul.f32 %v1016, 2.0
        %v1033 = vmul.f32 %v1017, 2.0
        %v1034 = vmul.f32 %v1018, 2.0
        %v1035 = vmul.f32 %v1019, 2.0
        %v1036 = vmul.f32 %v1020, 2.0
        %v1037 = vmul.f32 %v1021, 2.0
        %v1038 = vmul.f32 %v1022, 2.0
        %v1039 = vmul.f32 %v1023, 2.0
        %v1040 = vmul.f32 %v1024, 2.0
        %v1041 = vmul.f32 %v1025, 2.0
        %v1042 = vmul.f32 %v1026, 2.0
        %1043 = vst [vmem:[%s392] sm:$0xff] %v1027
        %1044 = vst [vmem:[%s392 + $0x8] sm:$0xff] %v1028
        %1045 = vst [vmem:[%s392 + $0x10] sm:$0xff] %v1029
        %1046 = vst [vmem:[%s392 + $0x18] sm:$0xff] %v1030
        %1047 = vst [vmem:[%s392 + $0x20] sm:$0xff] %v1031
        %1048 = vst [vmem:[%s392 + $0x28] sm:$0xff] %v1032
        %1049 = vst [vmem:[%s392 + $0x30] sm:$0xff] %v1033
        %1050 = vst [vmem:[%s392 + $0x38] sm:$0xff] %v1034
        %1051 = vst [vmem:[%s392 + $0x40] sm:$0xff] %v1035
        %1052 = vst [vmem:[%s392 + $0x48] sm:$0xff] %v1036
        %1053 = vst [vmem:[%s392 + $0x50] sm:$0xff] %v1037
        %1054 = vst [vmem:[%s392 + $0x58] sm:$0xff] %v1038
        %1055 = vst [vmem:[%s392 + $0x60] sm:$0xff] %v1039
        %1056 = vst [vmem:[%s392 + $0x68] sm:$0xff] %v1040
        %1057 = vst [vmem:[%s392 + $0x70] sm:$0xff] %v1041
        %1058 = vst [vmem:[%s392 + $0x78] sm:$0xff] %v1042
        %s1059 = sand.u32 %s255, 1
        %s1060 = scalar_lea.sflag [#allocation4], %s1059
        %s1061 = sand.u32 %s255, 1
        %s1062 = smul.addr %s1061, 128
        %s1063 = scalar_lea.vmem [#allocation5], %s1062
        // Predicated region
        $region65: #{tpu_custom_call.1} parent=59 // pred_check
          %p1064 = pneg %p265
        $region66: #{tpu_custom_call.1} parent=59 // pred_check_branch
          %1066 = sbr.rel (%p1064) target = $region68
        $region67: #{tpu_custom_call.1} parent=59 // pred_region
          %s1068 = ssub.s32 2048, 2048
          %1069 = vsyncadd %s1060, %s1068
          %s1070 = smul.addr %s27, 16
          %s1071 = smul.addr %s1070, 128
          %s1072 = scalar_lea.hbm %s10, %s1071
          %s1073 = sshll.u32 %s1063, 4
          %s1074 = int_to_ptr.vmem [resolvable:$true] %s1073
          %1079 = dma.vmem_to_hbm [thread:$0]  %s1074, 2048, %s1072, %s1060, 256, 256, 16
        $region68: #{tpu_custom_call.1} parent=59 // pred_fallthru
          _
      $region60: #{tpu_custom_call.1} parent=5 // pred_fallthru
        _
      %p1080 = scmp.le.s32.totalorder 2, %s22
      // Predicated region
      $region69: #{tpu_custom_call.1} parent=5 // pred_check
        %p1081 = pneg %p1080
      $region70: #{tpu_custom_call.1} parent=5 // pred_check_branch
        %1083 = sbr.rel (%p1081) target = $region72
      $region71: #{tpu_custom_call.1} parent=5 // pred_region
        %s1084 = ssub.s32 %s22, 2
        // Predicated region
        $region73: #{tpu_custom_call.1} parent=71 // pred_check
          %p1085 = pneg %p271
        $region74: #{tpu_custom_call.1} parent=71 // pred_check_branch
          %1087 = sbr.rel (%p1085) target = $region76
        $region75: #{tpu_custom_call.1} parent=71 // pred_region
          %s1088 = sand.u32 %s256, 1
          %s1089 = scalar_lea.sflag [#allocation4], %s1088
          %s1090 = sand.u32 %s256, 1
          %s1091 = smul.addr %s1090, 128
          %s1092 = scalar_lea.vmem [#allocation5], %s1091
          %1093 = dma.done %s1089, 2048
        $region76: #{tpu_custom_call.1} parent=71 // pred_fallthru
          _
      $region72: #{tpu_custom_call.1} parent=5 // pred_fallthru
        _
    $region6: #{tpu_custom_call.1} parent=1 // loop_footer
      %s26 = sadd.s32 1, %s22
    $region7: #{tpu_custom_call.1} parent=1 // loop_footer_branch
      %21 = sbr.rel target = $region3
    $region8: #{tpu_custom_call.1} parent=1 // loop_exit
      _
    %1094 = vsyncpa [#allocation3], 1
    %s1095 = scalar_lea.sflag [#allocation3], 1
    %1096 = vsyncpa %s1095, 1
    %1097 = vsyncpa [#allocation4], 1
    %s1098 = scalar_lea.sflag [#allocation4], 1
    %1099 = vsyncpa %s1098, 1

</llo_original>
